<compile_context>
chip_gen: v6e
topology: v6e:2x2x1
jax: 0.10.0
libtpu: 0.0.40
codegen_flags: <defaults>
</compile_context>

<pallas_src>
import jax
import jax.numpy as jnp
from jax import lax
from jax.experimental import pallas as pl
from jax.experimental.pallas import tpu as pltpu

IN_C = 64       # representation_2d channels
H1 = 32         # first hidden width
H2 = 16         # second hidden width
OUT_C = 3       # suction direction (3-vector)
OUT_PAD = 8     # 16->3 weight padded to 8 output rows (sublane aligned)
LN_EPS = 1e-5       # torch nn.LayerNorm default
NORM_EPS = 1e-12    # torch F.normalize default


# ----------------------------- kernel math ------------------------------------

def _layer_norm_cm(h, gamma, beta):
    """LayerNorm over channels (sublane axis 0). h: (C, tile_n) f32.
    One-pass statistics: the two reductions are independent."""
    mu = jnp.mean(h, axis=0, keepdims=True)              # (1, tile_n)
    ex2 = jnp.mean(h * h, axis=0, keepdims=True)         # (1, tile_n)
    var = ex2 - mu * mu
    return (h - mu) * lax.rsqrt(var + LN_EPS) * gamma + beta


def _suction_kernel(x_ref, w1_ref, w2_ref, w3_ref, prm_ref, out_ref):
    x = x_ref[...]                                        # (64, tile_n) bf16
    p = prm_ref[...]                                      # (32, 8) f32 slab
    g1, b1 = p[:, 0:1], p[:, 1:2]                         # (32, 1)
    g2, b2 = p[:H2, 2:3], p[:H2, 3:4]                     # (16, 1)
    b3 = p[:OUT_PAD, 4:5]                                 # (8, 1), rows 3..7 == 0

    # Linear(64->32, no bias) -> LayerNorm -> ReLU  (bf16 operands, f32 accum)
    h = jnp.dot(w1_ref[...], x, preferred_element_type=jnp.float32)      # (32, tn)
    h = jnp.maximum(_layer_norm_cm(h, g1, b1), 0.0)

    # Linear(32->16, no bias) -> LayerNorm -> ReLU
    h = jnp.dot(w2_ref[...], h.astype(jnp.bfloat16),
                preferred_element_type=jnp.float32)                      # (16, tn)
    h = jnp.maximum(_layer_norm_cm(h, g2, b2), 0.0)

    # Linear(16->3, bias), padded to 8 rows; rows 3..7 are exactly zero.
    y = jnp.dot(w3_ref[...], h.astype(jnp.bfloat16),
                preferred_element_type=jnp.float32) + b3                 # (8, tn)

    # Fused per-pixel L2 normalise over the 3 channels (== F.normalize(dim=1)).
    sumsq = jnp.sum(y * y, axis=0, keepdims=True)                        # (1, tn)
    inv = lax.rsqrt(jnp.maximum(sumsq, NORM_EPS * NORM_EPS))
    out_ref[...] = y[:OUT_C, :] * inv                                    # (3, tn)


# ----------------------------- wrapper -----------------------------------------

def _round_up(x, m):
    return (x + m - 1) // m * m


def _choose_tile_n(n, target=4096):
    """Pixels tile along the lane dim (multiple of 128).  Input is padded to a
    multiple of the tile, so no exact-divisor requirement.  Small N -> one fat
    step (best on single-TC v5e/v6e); large N -> grid >= 4 for v7x's 2 cores."""
    return min(_round_up(target, 128), _round_up(n, 128))


def suction_part_sampler_flat(rep_cm, params, *, tile_n=None):
    """rep_cm: (64, N) bf16 channel-major activations -> (3, N) f32."""
    c, n = rep_cm.shape
    assert c == IN_C, rep_cm.shape
    if tile_n is None:
        tile_n = _choose_tile_n(n)
    assert tile_n % 128 == 0, tile_n

    n_pad = _round_up(n, tile_n)
    if n_pad != n:
        rep_cm = jnp.pad(rep_cm, ((0, 0), (0, n_pad - n)))

    w1, w2, w3p, prm = params
    flops = 2 * n_pad * (IN_C * H1 + H1 * H2 + H2 * OUT_C)
    bytes_accessed = (n_pad * (IN_C * 2 + OUT_C * 4)
                      + 2 * (w1.size + w2.size + w3p.size) + 4 * prm.size)

    out = pl.pallas_call(
        _suction_kernel,
        out_shape=jax.ShapeDtypeStruct((OUT_C, n_pad), jnp.float32),
        grid_spec=pltpu.PrefetchScalarGridSpec(
            num_scalar_prefetch=0,
            grid=(n_pad // tile_n,),
            in_specs=[
                pl.BlockSpec((IN_C, tile_n), lambda i: (0, i)),   # activations (bf16)
                pl.BlockSpec((H1, IN_C), lambda i: (0, 0)),       # W1 (32,64) bf16
                pl.BlockSpec((H2, H1), lambda i: (0, 0)),         # W2 (16,32) bf16
                pl.BlockSpec((OUT_PAD, H2), lambda i: (0, 0)),    # W3 padded (8,16) bf16
                pl.BlockSpec((H1, 8), lambda i: (0, 0)),          # LN/bias slab f32
            ],
            out_specs=pl.BlockSpec((OUT_C, tile_n), lambda i: (0, i)),
        ),
        compiler_params=pltpu.CompilerParams(
            dimension_semantics=("parallel",),
            vmem_limit_bytes=32 * 1024 * 1024),
        cost_estimate=pl.CostEstimate(
            flops=int(flops),
            transcendentals=int(3 * n_pad),
            bytes_accessed=int(bytes_accessed)),
    )(rep_cm, w1, w2, w3p, prm)
    return out[:, :n]


def suction_part_sampler(representation_2d, params, *, batch, height, width,
                         tile_n=None):
    """representation_2d: (B*H*W, 64) f32 (the flattened per-pixel features).
    Returns (B, 3, H, W), matching the PyTorch module output."""
    # TODO(synk): the original reshape_for_layer_norm uses a global `camera`;
    # B/H/W are passed explicitly here instead.
    rep_cm = representation_2d.T.astype(jnp.bfloat16)       # layout plumbing (plain JAX)
    flat_cm = suction_part_sampler_flat(rep_cm, params, tile_n=tile_n)   # (3, N)
    # (3, B*H*W) -> (B, 3, H, W)  (NCHW, matching reshape_for_layer_norm reverse)
    return flat_cm.reshape(OUT_C, batch, height, width).transpose(1, 0, 2, 3)


# ----------------------------- params -------------------------------------------

def init_params(key):
    """Decoder weights in PyTorch (out, in) layout; matmul weights bf16."""
    ks = jax.random.split(key, 8)

    def lin_w(k, fan_out, fan_in):
        s = 1.0 / jnp.sqrt(jnp.float32(fan_in))
        return jax.random.uniform(k, (fan_out, fan_in), jnp.float32, -s, s)

    w1 = lin_w(ks[0], H1, IN_C).astype(jnp.bfloat16)          # (32, 64)
    w2 = lin_w(ks[1], H2, H1).astype(jnp.bfloat16)            # (16, 32)
    w3 = lin_w(ks[2], OUT_C, H2)                              # (3, 16) f32
    w3p = jnp.zeros((OUT_PAD, H2), jnp.float32).at[:OUT_C].set(w3)
    w3p = w3p.astype(jnp.bfloat16)                            # (8, 16), rows 3..7 zero
    s3 = 1.0 / jnp.sqrt(jnp.float32(H2))
    b3 = jax.random.uniform(ks[3], (OUT_C,), jnp.float32, -s3, s3)

    g1 = 1.0 + 0.1 * jax.random.normal(ks[4], (H1,), jnp.float32)
    b1 = 0.1 * jax.random.normal(ks[5], (H1,), jnp.float32)
    g2 = 1.0 + 0.1 * jax.random.normal(ks[6], (H2,), jnp.float32)
    b2 = 0.1 * jax.random.normal(ks[7], (H2,), jnp.float32)

    # Per-channel LN params + output bias packed into one (32, 8) f32 slab,
    # channels along sublanes (matching the channel-major kernel layout).
    prm = jnp.zeros((H1, 8), jnp.float32)
    prm = prm.at[:, 0].set(g1)
    prm = prm.at[:, 1].set(b1)
    prm = prm.at[:H2, 2].set(g2)
    prm = prm.at[:H2, 3].set(b2)
    prm = prm.at[:OUT_C, 4].set(b3)
    return (w1, w2, w3p, prm)


# ----------------------------- pure-JAX reference --------------------------------

def _reference_flat(rep, params):
    """Standard Linear->LayerNorm->ReLU decoder + F.normalize (row-major),
    mirroring the kernel's bf16 matmul operands / f32 accumulation."""
    w1, w2, w3p, prm = params
    w1f = w1.astype(jnp.float32)                 # (32, 64)
    w2f = w2.astype(jnp.float32)                 # (16, 32)
    w3f = w3p[:OUT_C].astype(jnp.float32)        # (3, 16)
    g1, b1 = prm[:, 0], prm[:, 1]
    g2, b2 = prm[:H2, 2], prm[:H2, 3]
    b3 = prm[:OUT_C, 4]

    def ln(x, g, b):
        mu = jnp.mean(x, axis=-1, keepdims=True)
        var = jnp.mean((x - mu) ** 2, axis=-1, keepdims=True)
        return (x - mu) / jnp.sqrt(var + LN_EPS) * g + b

    rb = lambda a: a.astype(jnp.bfloat16).astype(jnp.float32)
    dot = lambda a, b: jnp.dot(a, b, precision=lax.Precision.HIGHEST)

    h = jnp.maximum(ln(dot(rb(rep), w1f.T), g1, b1), 0.0)
    h = jnp.maximum(ln(dot(rb(h), w2f.T), g2, b2), 0.0)
    y = dot(rb(h), w3f.T) + b3                                  # (N, 3)
    nrm = jnp.sqrt(jnp.sum(y * y, axis=-1, keepdims=True))
    return y / jnp.maximum(nrm, NORM_EPS)


# ----------------------------- main ----------------------------------------------

if __name__ == "__main__":
    B, H, W = 2, 16, 16
    N = B * H * W                       # 512 flattened pixels

    key = jax.random.PRNGKey(0)
    k_x, k_p = jax.random.split(key)
    representation_2d = jax.random.normal(k_x, (N, IN_C), jnp.float32)
    params = init_params(k_p)

    output = suction_part_sampler(representation_2d, params,
                                  batch=B, height=H, width=W)   # (B, 3, H, W)
    output = jax.block_until_ready(output)

    ref = _reference_flat(representation_2d, params)            # (N, 3)
    ref = ref.reshape(B, H, W, OUT_C).transpose(0, 3, 1, 2)     # (B, 3, H, W)

    assert output.shape == (B, OUT_C, H, W), output.shape
    err = float(jnp.max(jnp.abs(output - ref)))
    assert err < 5e-3, err
    print("KERNEL_OK")
</pallas_src>

<mosaic_0001>
module attributes {stable_mosaic.version = 11 : i64} {
  func.func @_suction_kernel(%arg0: i32, %arg1: memref<64x512xbf16, #tpu.memory_space<vmem>>, %arg2: memref<32x64xbf16, #tpu.memory_space<vmem>>, %arg3: memref<16x32xbf16, #tpu.memory_space<vmem>>, %arg4: memref<8x16xbf16, #tpu.memory_space<vmem>>, %arg5: memref<32x8xf32, #tpu.memory_space<vmem>>, %arg6: memref<3x512xf32, #tpu.memory_space<vmem>>) attributes {dimension_semantics = [#tpu.dimension_semantics<parallel>], iteration_bounds = array<i64: 1>, scalar_prefetch = 0 : i64, scratch_operands = 0 : i64, tpu.core_type = #tpu.core_type<tc>, window_params = [{transform_indices = @transform_0, window_bounds = array<i64: 64, 512>}, {pipeline_mode = #tpu.pipeline_mode<synchronous>, transform_indices = @transform_1, window_bounds = array<i64: 32, 64>}, {pipeline_mode = #tpu.pipeline_mode<synchronous>, transform_indices = @transform_2, window_bounds = array<i64: 16, 32>}, {pipeline_mode = #tpu.pipeline_mode<synchronous>, transform_indices = @transform_3, window_bounds = array<i64: 8, 16>}, {pipeline_mode = #tpu.pipeline_mode<synchronous>, transform_indices = @transform_4, window_bounds = array<i64: 32, 8>}, {transform_indices = @transform_5, window_bounds = array<i64: 3, 512>}]} {
    %c0 = arith.constant 0 : index
    %c0_0 = arith.constant 0 : index
    %0 = vector.load %arg1[%c0, %c0_0] : memref<64x512xbf16, #tpu.memory_space<vmem>>, vector<64x512xbf16>
    %c0_1 = arith.constant 0 : index
    %c0_2 = arith.constant 0 : index
    %1 = vector.load %arg5[%c0_1, %c0_2] : memref<32x8xf32, #tpu.memory_space<vmem>>, vector<32x8xf32>
    %2 = vector.extract_strided_slice %1 {offsets = [0, 0], sizes = [32, 1], strides = [1, 1]} : vector<32x8xf32> to vector<32x1xf32>
    %3 = vector.extract_strided_slice %1 {offsets = [0, 1], sizes = [32, 1], strides = [1, 1]} : vector<32x8xf32> to vector<32x1xf32>
    %4 = vector.extract_strided_slice %1 {offsets = [0, 2], sizes = [16, 1], strides = [1, 1]} : vector<32x8xf32> to vector<16x1xf32>
    %5 = vector.extract_strided_slice %1 {offsets = [0, 3], sizes = [16, 1], strides = [1, 1]} : vector<32x8xf32> to vector<16x1xf32>
    %6 = vector.extract_strided_slice %1 {offsets = [0, 4], sizes = [8, 1], strides = [1, 1]} : vector<32x8xf32> to vector<8x1xf32>
    %c0_3 = arith.constant 0 : index
    %c0_4 = arith.constant 0 : index
    %7 = vector.load %arg2[%c0_3, %c0_4] : memref<32x64xbf16, #tpu.memory_space<vmem>>, vector<32x64xbf16>
    %cst = arith.constant dense<0.000000e+00> : vector<32x512xf32>
    %8 = tpu.matmul %7, %0, %cst {dimension_numbers = #tpu.dot_dimension_numbers<[1], [0], [0], [1], [0, 0, 1, 1], [], []>} : vector<32x64xbf16>, vector<64x512xbf16>, vector<32x512xf32> -> vector<32x512xf32>
    %cst_5 = arith.constant dense<0.000000e+00> : vector<512xf32>
    %9 = vector.multi_reduction <add>, %8, %cst_5 [0] : vector<32x512xf32> to vector<512xf32>
    %10 = vector.shape_cast %9 : vector<512xf32> to vector<1x512xf32>
    %cst_6 = arith.constant 3.200000e+01 : f32
    %11 = vector.broadcast %cst_6 : f32 to vector<1x512xf32>
    %12 = arith.divf %10, %11 : vector<1x512xf32>
    %13 = arith.mulf %8, %8 : vector<32x512xf32>
    %cst_7 = arith.constant dense<0.000000e+00> : vector<512xf32>
    %14 = vector.multi_reduction <add>, %13, %cst_7 [0] : vector<32x512xf32> to vector<512xf32>
    %15 = vector.shape_cast %14 : vector<512xf32> to vector<1x512xf32>
    %cst_8 = arith.constant 3.200000e+01 : f32
    %16 = vector.broadcast %cst_8 : f32 to vector<1x512xf32>
    %17 = arith.divf %15, %16 : vector<1x512xf32>
    %18 = arith.mulf %12, %12 : vector<1x512xf32>
    %19 = arith.subf %17, %18 : vector<1x512xf32>
    %20 = vector.broadcast %12 : vector<1x512xf32> to vector<32x512xf32>
    %21 = arith.subf %8, %20 : vector<32x512xf32>
    %cst_9 = arith.constant 9.99999974E-6 : f32
    %22 = vector.broadcast %cst_9 : f32 to vector<1x512xf32>
    %23 = arith.addf %19, %22 : vector<1x512xf32>
    %24 = math.rsqrt %23 : vector<1x512xf32>
    %25 = vector.broadcast %24 : vector<1x512xf32> to vector<32x512xf32>
    %26 = arith.mulf %21, %25 : vector<32x512xf32>
    %27 = vector.broadcast %2 : vector<32x1xf32> to vector<32x512xf32>
    %28 = arith.mulf %26, %27 : vector<32x512xf32>
    %29 = vector.broadcast %3 : vector<32x1xf32> to vector<32x512xf32>
    %30 = arith.addf %28, %29 : vector<32x512xf32>
    %cst_10 = arith.constant 0.000000e+00 : f32
    %31 = vector.broadcast %cst_10 : f32 to vector<32x512xf32>
    %32 = arith.maximumf %30, %31 : vector<32x512xf32>
    %c0_11 = arith.constant 0 : index
    %c0_12 = arith.constant 0 : index
    %33 = vector.load %arg3[%c0_11, %c0_12] : memref<16x32xbf16, #tpu.memory_space<vmem>>, vector<16x32xbf16>
    %34 = arith.truncf %32 : vector<32x512xf32> to vector<32x512xbf16>
    %cst_13 = arith.constant dense<0.000000e+00> : vector<16x512xf32>
    %35 = tpu.matmul %33, %34, %cst_13 {dimension_numbers = #tpu.dot_dimension_numbers<[1], [0], [0], [1], [0, 0, 1, 1], [], []>} : vector<16x32xbf16>, vector<32x512xbf16>, vector<16x512xf32> -> vector<16x512xf32>
    %cst_14 = arith.constant dense<0.000000e+00> : vector<512xf32>
    %36 = vector.multi_reduction <add>, %35, %cst_14 [0] : vector<16x512xf32> to vector<512xf32>
    %37 = vector.shape_cast %36 : vector<512xf32> to vector<1x512xf32>
    %cst_15 = arith.constant 1.600000e+01 : f32
    %38 = vector.broadcast %cst_15 : f32 to vector<1x512xf32>
    %39 = arith.divf %37, %38 : vector<1x512xf32>
    %40 = arith.mulf %35, %35 : vector<16x512xf32>
    %cst_16 = arith.constant dense<0.000000e+00> : vector<512xf32>
    %41 = vector.multi_reduction <add>, %40, %cst_16 [0] : vector<16x512xf32> to vector<512xf32>
    %42 = vector.shape_cast %41 : vector<512xf32> to vector<1x512xf32>
    %cst_17 = arith.constant 1.600000e+01 : f32
    %43 = vector.broadcast %cst_17 : f32 to vector<1x512xf32>
    %44 = arith.divf %42, %43 : vector<1x512xf32>
    %45 = arith.mulf %39, %39 : vector<1x512xf32>
    %46 = arith.subf %44, %45 : vector<1x512xf32>
    %47 = vector.broadcast %39 : vector<1x512xf32> to vector<16x512xf32>
    %48 = arith.subf %35, %47 : vector<16x512xf32>
    %cst_18 = arith.constant 9.99999974E-6 : f32
    %49 = vector.broadcast %cst_18 : f32 to vector<1x512xf32>
    %50 = arith.addf %46, %49 : vector<1x512xf32>
    %51 = math.rsqrt %50 : vector<1x512xf32>
    %52 = vector.broadcast %51 : vector<1x512xf32> to vector<16x512xf32>
    %53 = arith.mulf %48, %52 : vector<16x512xf32>
    %54 = vector.broadcast %4 : vector<16x1xf32> to vector<16x512xf32>
    %55 = arith.mulf %53, %54 : vector<16x512xf32>
    %56 = vector.broadcast %5 : vector<16x1xf32> to vector<16x512xf32>
    %57 = arith.addf %55, %56 : vector<16x512xf32>
    %cst_19 = arith.constant 0.000000e+00 : f32
    %58 = vector.broadcast %cst_19 : f32 to vector<16x512xf32>
    %59 = arith.maximumf %57, %58 : vector<16x512xf32>
    %c0_20 = arith.constant 0 : index
    %c0_21 = arith.constant 0 : index
    %60 = vector.load %arg4[%c0_20, %c0_21] : memref<8x16xbf16, #tpu.memory_space<vmem>>, vector<8x16xbf16>
    %61 = arith.truncf %59 : vector<16x512xf32> to vector<16x512xbf16>
    %cst_22 = arith.constant dense<0.000000e+00> : vector<8x512xf32>
    %62 = tpu.matmul %60, %61, %cst_22 {dimension_numbers = #tpu.dot_dimension_numbers<[1], [0], [0], [1], [0, 0, 1, 1], [], []>} : vector<8x16xbf16>, vector<16x512xbf16>, vector<8x512xf32> -> vector<8x512xf32>
    %63 = vector.broadcast %6 : vector<8x1xf32> to vector<8x512xf32>
    %64 = arith.addf %62, %63 : vector<8x512xf32>
    %65 = arith.mulf %64, %64 : vector<8x512xf32>
    %cst_23 = arith.constant dense<0.000000e+00> : vector<512xf32>
    %66 = vector.multi_reduction <add>, %65, %cst_23 [0] : vector<8x512xf32> to vector<512xf32>
    %67 = vector.shape_cast %66 : vector<512xf32> to vector<1x512xf32>
    %cst_24 = arith.constant 1.000000e-24 : f32
    %68 = vector.broadcast %cst_24 : f32 to vector<1x512xf32>
    %69 = arith.maximumf %67, %68 : vector<1x512xf32>
    %70 = math.rsqrt %69 : vector<1x512xf32>
    %71 = vector.extract_strided_slice %64 {offsets = [0, 0], sizes = [3, 512], strides = [1, 1]} : vector<8x512xf32> to vector<3x512xf32>
    %72 = vector.broadcast %70 : vector<1x512xf32> to vector<3x512xf32>
    %73 = arith.mulf %71, %72 : vector<3x512xf32>
    %c0_25 = arith.constant 0 : index
    %c0_26 = arith.constant 0 : index
    %74 = vector.load %arg6[%c0_25, %c0_26] : memref<3x512xf32, #tpu.memory_space<vmem>>, vector<3x512xf32>
    tpu.vector_store %arg6[%c0_25, %c0_26], %73 {strides = array<i32>} : memref<3x512xf32, #tpu.memory_space<vmem>>, vector<3x512xf32>,
    return
  }
  func.func @transform_0(%arg0: i32) -> (i32, i32) {
    %c0_i32 = arith.constant 0 : i32
    %c0_i32_0 = arith.constant 0 : i32
    return %c0_i32, %arg0 : i32, i32
  }
  func.func @transform_1(%arg0: i32) -> (i32, i32) {
    %c0_i32 = arith.constant 0 : i32
    %c0_i32_0 = arith.constant 0 : i32
    %c0_i32_1 = arith.constant 0 : i32
    return %c0_i32, %c0_i32_0 : i32, i32
  }
  func.func @transform_2(%arg0: i32) -> (i32, i32) {
    %c0_i32 = arith.constant 0 : i32
    %c0_i32_0 = arith.constant 0 : i32
    %c0_i32_1 = arith.constant 0 : i32
    return %c0_i32, %c0_i32_0 : i32, i32
  }
  func.func @transform_3(%arg0: i32) -> (i32, i32) {
    %c0_i32 = arith.constant 0 : i32
    %c0_i32_0 = arith.constant 0 : i32
    %c0_i32_1 = arith.constant 0 : i32
    return %c0_i32, %c0_i32_0 : i32, i32
  }
  func.func @transform_4(%arg0: i32) -> (i32, i32) {
    %c0_i32 = arith.constant 0 : i32
    %c0_i32_0 = arith.constant 0 : i32
    %c0_i32_1 = arith.constant 0 : i32
    return %c0_i32, %c0_i32_0 : i32, i32
  }
  func.func @transform_5(%arg0: i32) -> (i32, i32) {
    %c0_i32 = arith.constant 0 : i32
    %c0_i32_0 = arith.constant 0 : i32
    return %c0_i32, %arg0 : i32, i32
  }
}

</mosaic_0001>

<llo_original>
// kernel: tpu_custom_call.1
$region0: #{tpu_custom_call.1}
  #allocation0 [shape = 'u32[]', space=smem, size = 0x4, offset = 0x4, fixed_abs, tag = 'smem constant byte address 0x4 - core index']
  #allocation1 [shape = 'u32[144,128]{1,0:T(1,128)}', space=vmem, size = 0x12000, scoped, tag = 'internal scratch']
  %s0 = inlined_call_operand.hbm [shape: bf16[64,512], index: 0, kind: input, shape index: {}]
  %s1 = inlined_call_operand.vmem [shape: bf16[32,64], index: 1, kind: input, shape index: {}]
  %s2 = inlined_call_operand.vmem [shape: bf16[16,32], index: 2, kind: input, shape index: {}]
  %s3 = inlined_call_operand.vmem [shape: bf16[8,16], index: 3, kind: input, shape index: {}]
  %s4 = inlined_call_operand.vmem [shape: f32[32,8], index: 4, kind: input, shape index: {}]
  %s5 = inlined_call_operand.hbm [shape: f32[3,512], index: 5, kind: output, shape index: {}]
  %s6 = sld [smem:[#allocation0]]
  $region34: #{tpu_custom_call.1} parent=0
    _
  %s8 = ssub.s32 1, %s6
  %s9 = scalar_select 0, %s8, %s6
  $region1: #{tpu_custom_call.1} parent=0
    #allocation2 [shape = 'u8[65536]{0}', space=vmem, size = 0x10000, scoped, tag = 'input window, operand 0, single buffered']
    #allocation3 [shape = 's32[1]{0}', space=sflag, size = 0x4, scoped, tag = 'scoped memory for tpu_custom_call.1']
    #allocation4 [shape = 's32[1]{0}', space=sflag, size = 0x4, scoped, tag = 'scoped memory for tpu_custom_call.1']
    #allocation5 [shape = 'u8[8192]{0}', space=vmem, size = 0x2000, scoped, tag = 'output window, operand 0, single buffered']
    %10 = vsyncpa [#allocation3], 0
    %11 = vsyncpa [#allocation4], 0
    // Predicated region
    $region2: #{tpu_custom_call.1} parent=1 // pred_check
      _
    $region3: #{tpu_custom_call.1} parent=1 // pred_check_branch
      %13 = sbr.rel (0) target = $region5
    $region4: #{tpu_custom_call.1} parent=1 // pred_region
      %s15 = ssub.s32 2048, 2048
      %16 = vsyncadd [#allocation3], %s15
      %s17 = sshll.u32 [#allocation2], 4
      %s18 = int_to_ptr.vmem [resolvable:$true] %s17
      %23 = dma.hbm_to_vmem [thread:$0]  %s0, 2048, %s18, [#allocation3], 256, 256, 16
    $region5: #{tpu_custom_call.1} parent=1 // pred_fallthru
      _
    // Predicated region
    $region6: #{tpu_custom_call.1} parent=1 // pred_check
      _
    $region7: #{tpu_custom_call.1} parent=1 // pred_check_branch
      %25 = sbr.rel (0) target = $region9
    $region8: #{tpu_custom_call.1} parent=1 // pred_region
      _
    $region9: #{tpu_custom_call.1} parent=1 // pred_fallthru
      _
    // Predicated region
    $region10: #{tpu_custom_call.1} parent=1 // pred_check
      _
    $region11: #{tpu_custom_call.1} parent=1 // pred_check_branch
      %27 = sbr.rel (0) target = $region13
    $region12: #{tpu_custom_call.1} parent=1 // pred_region
      _
    $region13: #{tpu_custom_call.1} parent=1 // pred_fallthru
      _
    // Predicated region
    $region14: #{tpu_custom_call.1} parent=1 // pred_check
      _
    $region15: #{tpu_custom_call.1} parent=1 // pred_check_branch
      %29 = sbr.rel (0) target = $region17
    $region16: #{tpu_custom_call.1} parent=1 // pred_region
      _
    $region17: #{tpu_custom_call.1} parent=1 // pred_fallthru
      _
    // Predicated region
    $region18: #{tpu_custom_call.1} parent=1 // pred_check
      _
    $region19: #{tpu_custom_call.1} parent=1 // pred_check_branch
      %31 = sbr.rel (0) target = $region21
    $region20: #{tpu_custom_call.1} parent=1 // pred_region
      _
    $region21: #{tpu_custom_call.1} parent=1 // pred_fallthru
      _
    // Predicated region
    $region22: #{tpu_custom_call.1} parent=1 // pred_check
      _
    $region23: #{tpu_custom_call.1} parent=1 // pred_check_branch
      %33 = sbr.rel (0) target = $region25
    $region24: #{tpu_custom_call.1} parent=1 // pred_region
      %34 = dma.done [#allocation3], 2048
    $region25: #{tpu_custom_call.1} parent=1 // pred_fallthru
      _
    %v36 = vld [vmem:[#allocation2] sm:$0xff]
    %v37 = vld [vmem:[#allocation2 + $0x8] sm:$0xff]
    %v38 = vld [vmem:[#allocation2 + $0x10] sm:$0xff]
    %v39 = vld [vmem:[#allocation2 + $0x18] sm:$0xff]
    %v40 = vld [vmem:[#allocation2 + $0x20] sm:$0xff]
    %v41 = vld [vmem:[#allocation2 + $0x28] sm:$0xff]
    %v42 = vld [vmem:[#allocation2 + $0x30] sm:$0xff]
    %v43 = vld [vmem:[#allocation2 + $0x38] sm:$0xff]
    %v44 = vld [vmem:[#allocation2 + $0x40] sm:$0xff]
    %v45 = vld [vmem:[#allocation2 + $0x48] sm:$0xff]
    %v46 = vld [vmem:[#allocation2 + $0x50] sm:$0xff]
    %v47 = vld [vmem:[#allocation2 + $0x58] sm:$0xff]
    %v48 = vld [vmem:[#allocation2 + $0x60] sm:$0xff]
    %v49 = vld [vmem:[#allocation2 + $0x68] sm:$0xff]
    %v50 = vld [vmem:[#allocation2 + $0x70] sm:$0xff]
    %v51 = vld [vmem:[#allocation2 + $0x78] sm:$0xff]
    %v52 = vld [vmem:[%s4] sm:$0xff]
    %v53 = vld [vmem:[%s4 + $0x8] sm:$0xff]
    %v54 = vld [vmem:[%s4 + $0x10] sm:$0xff]
    %v55 = vld [vmem:[%s4 + $0x18] sm:$0xff]
    %v56 = vld [vmem:[%s1] sm:$0xf]
    %v57 = vld [vmem:[%s1 + $0x4] sm:$0xf]
    %v58 = vld [vmem:[%s1 + $0x8] sm:$0xf]
    %v59 = vld [vmem:[%s1 + $0xc] sm:$0xf]
    %v64 = vunpack.c.l.b16 %v56
    %v65 = vunpack.c.l.b16 %v57
    %v66 = vunpack.c.l.b16 %v58
    %v67 = vunpack.c.l.b16 %v59
    %v68 = vpack.c.b16 %v65, %v64
    %v69 = vpack.c.b16 %v67, %v66
    %v86 = vunpack.c.l.b16 %v36
    %v87 = vunpack.c.h.b16 %v36
    %v88 = vunpack.c.l.b16 %v37
    %v89 = vunpack.c.h.b16 %v37
    %v90 = vunpack.c.l.b16 %v38
    %v91 = vunpack.c.h.b16 %v38
    %v92 = vunpack.c.l.b16 %v39
    %v93 = vunpack.c.h.b16 %v39
    %v94 = vunpack.c.l.b16 %v40
    %v95 = vunpack.c.h.b16 %v40
    %v96 = vunpack.c.l.b16 %v41
    %v97 = vunpack.c.h.b16 %v41
    %v98 = vunpack.c.l.b16 %v42
    %v99 = vunpack.c.h.b16 %v42
    %v100 = vunpack.c.l.b16 %v43
    %v101 = vunpack.c.h.b16 %v43
    %v102 = vunpack.c.l.b16 %v44
    %v103 = vunpack.c.h.b16 %v44
    %v104 = vunpack.c.l.b16 %v45
    %v105 = vunpack.c.h.b16 %v45
    %v106 = vunpack.c.l.b16 %v46
    %v107 = vunpack.c.h.b16 %v46
    %v108 = vunpack.c.l.b16 %v47
    %v109 = vunpack.c.h.b16 %v47
    %v110 = vunpack.c.l.b16 %v48
    %v111 = vunpack.c.h.b16 %v48
    %v112 = vunpack.c.l.b16 %v49
    %v113 = vunpack.c.h.b16 %v49
    %v114 = vunpack.c.l.b16 %v50
    %v115 = vunpack.c.h.b16 %v50
    %v116 = vunpack.c.l.b16 %v51
    %v117 = vunpack.c.h.b16 %v51
    %v118 = vpack.c.b16 %v90, %v86
    %v119 = vpack.c.b16 %v91, %v87
    %v120 = vpack.c.b16 %v92, %v88
    %v121 = vpack.c.b16 %v93, %v89
    %v122 = vpack.c.b16 %v98, %v94
    %v123 = vpack.c.b16 %v99, %v95
    %v124 = vpack.c.b16 %v100, %v96
    %v125 = vpack.c.b16 %v101, %v97
    %v126 = vpack.c.b16 %v106, %v102
    %v127 = vpack.c.b16 %v107, %v103
    %v128 = vpack.c.b16 %v108, %v104
    %v129 = vpack.c.b16 %v109, %v105
    %v130 = vpack.c.b16 %v114, %v110
    %v131 = vpack.c.b16 %v115, %v111
    %v132 = vpack.c.b16 %v116, %v112
    %v133 = vpack.c.b16 %v117, %v113
    %vm150 = vcmask 523264
    %v152 = vsel %vm150, %v68, 0
    %v155 = vsel %vm150, %v69, 0
    %157 = vmatprep.subr.bf16.mxu0 0
    %158 = vmatpush1.bf16.msra.mxu0 0
    %159 = vmatprep.subr.bf16.mxu0 0
    %160 = vmatpush1.bf16.msra.mxu0 0
    %161 = vmatprep.subr.bf16.mxu0 0
    %162 = vmatpush1.bf16.msra.mxu0 0
    %163 = vmatprep.subr.bf16.mxu0 0
    %164 = vmatpush1.bf16.msra.mxu0 0
    %165 = vmatprep.subr.bf16.mxu0 %v131
    %166 = vmatpush1.bf16.msra.mxu0 %v130
    %167 = vmatprep.subr.bf16.mxu0 %v127
    %168 = vmatpush1.bf16.msra.mxu0 %v126
    %169 = vmatprep.subr.bf16.mxu0 %v123
    %170 = vmatpush1.bf16.msra.mxu0 %v122
    %171 = vmatprep.subr.bf16.mxu0 %v119
    %172 = vmatpush1.bf16.msra.mxu0 %v118
    %173 = vmatprep.subr.bf16.mxu0 0
    %174 = vmatpush2.bf16.msra.mxu0 0
    %175 = vmatprep.subr.bf16.mxu0 0
    %176 = vmatpush2.bf16.msra.mxu0 0
    %177 = vmatprep.subr.bf16.mxu0 0
    %178 = vmatpush2.bf16.msra.mxu0 0
    %179 = vmatprep.subr.bf16.mxu0 0
    %180 = vmatpush2.bf16.msra.mxu0 0
    %181 = vmatprep.subr.bf16.mxu0 0
    %182 = vmatpush2.bf16.msra.mxu0 0
    %183 = vmatprep.subr.bf16.mxu0 0
    %184 = vmatpush2.bf16.msra.mxu0 0
    %185 = vmatprep.subr.bf16.mxu0 0
    %186 = vmatpush2.bf16.msra.mxu0 0
    %187 = vmatprep.subr.bf16.mxu0 0
    %188 = vmatpush2.bf16.msra.mxu0 0
    %189 = vmatprep.mubr.bf16.mxu0 0
    %190 = vmatmul.mubr.bf16.gmra.mxu0 %v152
    %v191 = vpop.f32.mrf.mxu0
    %v192 = vadd.f32 0.0, %v191
    %v193 = vpop.f32.mrf.mxu0
    %v194 = vadd.f32 0.0, %v193
    %v195 = vpop.f32.mrf.mxu0
    %v196 = vadd.f32 0.0, %v195
    %v197 = vpop.f32.mrf.mxu0
    %v198 = vadd.f32 0.0, %v197
    %199 = vmatprep.mubr.bf16.mxu0 0
    %200 = vmatmul.mubr.bf16.gmra.mxu0 %v155
    %v201 = vpop.f32.mrf.mxu0
    %v202 = vadd.f32 0.0, %v201
    %v203 = vpop.f32.mrf.mxu0
    %v204 = vadd.f32 0.0, %v203
    %v205 = vpop.f32.mrf.mxu0
    %v206 = vadd.f32 0.0, %v205
    %v207 = vpop.f32.mrf.mxu0
    %v208 = vadd.f32 0.0, %v207
    %209 = vdwg.mxu0
    %210 = vmatprep.subr.bf16.mxu0 0
    %211 = vmatpush1.bf16.msra.mxu0 0
    %212 = vmatprep.subr.bf16.mxu0 0
    %213 = vmatpush1.bf16.msra.mxu0 0
    %214 = vmatprep.subr.bf16.mxu0 0
    %215 = vmatpush1.bf16.msra.mxu0 0
    %216 = vmatprep.subr.bf16.mxu0 0
    %217 = vmatpush1.bf16.msra.mxu0 0
    %218 = vmatprep.subr.bf16.mxu0 %v133
    %219 = vmatpush1.bf16.msra.mxu0 %v132
    %220 = vmatprep.subr.bf16.mxu0 %v129
    %221 = vmatpush1.bf16.msra.mxu0 %v128
    %222 = vmatprep.subr.bf16.mxu0 %v125
    %223 = vmatpush1.bf16.msra.mxu0 %v124
    %224 = vmatprep.subr.bf16.mxu0 %v121
    %225 = vmatpush1.bf16.msra.mxu0 %v120
    %226 = vmatprep.subr.bf16.mxu0 0
    %227 = vmatpush2.bf16.msra.mxu0 0
    %228 = vmatprep.subr.bf16.mxu0 0
    %229 = vmatpush2.bf16.msra.mxu0 0
    %230 = vmatprep.subr.bf16.mxu0 0
    %231 = vmatpush2.bf16.msra.mxu0 0
    %232 = vmatprep.subr.bf16.mxu0 0
    %233 = vmatpush2.bf16.msra.mxu0 0
    %234 = vmatprep.subr.bf16.mxu0 0
    %235 = vmatpush2.bf16.msra.mxu0 0
    %236 = vmatprep.subr.bf16.mxu0 0
    %237 = vmatpush2.bf16.msra.mxu0 0
    %238 = vmatprep.subr.bf16.mxu0 0
    %239 = vmatpush2.bf16.msra.mxu0 0
    %240 = vmatprep.subr.bf16.mxu0 0
    %241 = vmatpush2.bf16.msra.mxu0 0
    %242 = vmatprep.mubr.bf16.mxu0 0
    %243 = vmatmul.mubr.bf16.gmra.mxu0 %v152
    %v244 = vpop.f32.mrf.mxu0
    %v245 = vadd.f32 0.0, %v244
    %v246 = vpop.f32.mrf.mxu0
    %v247 = vadd.f32 0.0, %v246
    %v248 = vpop.f32.mrf.mxu0
    %v249 = vadd.f32 0.0, %v248
    %v250 = vpop.f32.mrf.mxu0
    %v251 = vadd.f32 0.0, %v250
    %252 = vmatprep.mubr.bf16.mxu0 0
    %253 = vmatmul.mubr.bf16.gmra.mxu0 %v155
    %v254 = vpop.f32.mrf.mxu0
    %v255 = vadd.f32 0.0, %v254
    %v256 = vpop.f32.mrf.mxu0
    %v257 = vadd.f32 0.0, %v256
    %v258 = vpop.f32.mrf.mxu0
    %v259 = vadd.f32 0.0, %v258
    %v260 = vpop.f32.mrf.mxu0
    %v261 = vadd.f32 0.0, %v260
    %262 = vdwg.mxu0
    %v263 = vadd.f32 %v192, %v196
    %v264 = vadd.f32 %v263, %v202
    %v265 = vadd.f32 %v264, %v206
    %v266 = vrot.slane %v265, 4
    %v267 = vadd.f32 %v265, %v266
    %v268 = vrot.slane %v267, 2
    %v269 = vadd.f32 %v267, %v268
    %v270 = vrot.slane %v269, 1
    %v271 = vadd.f32 %v269, %v270
    %v272 = vadd.f32 %v194, %v198
    %v273 = vadd.f32 %v272, %v204
    %v274 = vadd.f32 %v273, %v208
    %v275 = vrot.slane %v274, 4
    %v276 = vadd.f32 %v274, %v275
    %v277 = vrot.slane %v276, 2
    %v278 = vadd.f32 %v276, %v277
    %v279 = vrot.slane %v278, 1
    %v280 = vadd.f32 %v278, %v279
    %v281 = vadd.f32 %v245, %v249
    %v282 = vadd.f32 %v281, %v255
    %v283 = vadd.f32 %v282, %v259
    %v284 = vrot.slane %v283, 4
    %v285 = vadd.f32 %v283, %v284
    %v286 = vrot.slane %v285, 2
    %v287 = vadd.f32 %v285, %v286
    %v288 = vrot.slane %v287, 1
    %v289 = vadd.f32 %v287, %v288
    %v290 = vadd.f32 %v247, %v251
    %v291 = vadd.f32 %v290, %v257
    %v292 = vadd.f32 %v291, %v261
    %v293 = vrot.slane %v292, 4
    %v294 = vadd.f32 %v292, %v293
    %v295 = vrot.slane %v294, 2
    %v296 = vadd.f32 %v294, %v295
    %v297 = vrot.slane %v296, 1
    %v298 = vadd.f32 %v296, %v297
    %v299 = vrcp.pop 32.0
    %v300 = vmul.f32 %v271, %v299
    %v301 = vmul.f32 %v280, %v299
    %v302 = vmul.f32 %v289, %v299
    %v303 = vmul.f32 %v298, %v299
    %v304 = vmul.f32 %v192, %v192
    %v305 = vmul.f32 %v194, %v194
    %v306 = vmul.f32 %v245, %v245
    %v307 = vmul.f32 %v247, %v247
    %v308 = vmul.f32 %v196, %v196
    %v309 = vmul.f32 %v198, %v198
    %v310 = vmul.f32 %v249, %v249
    %v311 = vmul.f32 %v251, %v251
    %v312 = vmul.f32 %v202, %v202
    %v313 = vmul.f32 %v204, %v204
    %v314 = vmul.f32 %v255, %v255
    %v315 = vmul.f32 %v257, %v257
    %v316 = vmul.f32 %v206, %v206
    %v317 = vmul.f32 %v208, %v208
    %v318 = vmul.f32 %v259, %v259
    %v319 = vmul.f32 %v261, %v261
    %v320 = vadd.f32 %v304, %v308
    %v321 = vadd.f32 %v320, %v312
    %v322 = vadd.f32 %v321, %v316
    %v323 = vrot.slane %v322, 4
    %v324 = vadd.f32 %v322, %v323
    %v325 = vrot.slane %v324, 2
    %v326 = vadd.f32 %v324, %v325
    %v327 = vrot.slane %v326, 1
    %v328 = vadd.f32 %v326, %v327
    %v329 = vadd.f32 %v305, %v309
    %v330 = vadd.f32 %v329, %v313
    %v331 = vadd.f32 %v330, %v317
    %v332 = vrot.slane %v331, 4
    %v333 = vadd.f32 %v331, %v332
    %v334 = vrot.slane %v333, 2
    %v335 = vadd.f32 %v333, %v334
    %v336 = vrot.slane %v335, 1
    %v337 = vadd.f32 %v335, %v336
    %v338 = vadd.f32 %v306, %v310
    %v339 = vadd.f32 %v338, %v314
    %v340 = vadd.f32 %v339, %v318
    %v341 = vrot.slane %v340, 4
    %v342 = vadd.f32 %v340, %v341
    %v343 = vrot.slane %v342, 2
    %v344 = vadd.f32 %v342, %v343
    %v345 = vrot.slane %v344, 1
    %v346 = vadd.f32 %v344, %v345
    %v347 = vadd.f32 %v307, %v311
    %v348 = vadd.f32 %v347, %v315
    %v349 = vadd.f32 %v348, %v319
    %v350 = vrot.slane %v349, 4
    %v351 = vadd.f32 %v349, %v350
    %v352 = vrot.slane %v351, 2
    %v353 = vadd.f32 %v351, %v352
    %v354 = vrot.slane %v353, 1
    %v355 = vadd.f32 %v353, %v354
    %v356 = vmul.f32 %v328, %v299
    %v357 = vmul.f32 %v337, %v299
    %v358 = vmul.f32 %v346, %v299
    %v359 = vmul.f32 %v355, %v299
    %v360 = vmul.f32 %v300, %v300
    %v361 = vmul.f32 %v301, %v301
    %v362 = vmul.f32 %v302, %v302
    %v363 = vmul.f32 %v303, %v303
    %v364 = vsub.f32 %v356, %v360
    %v365 = vsub.f32 %v357, %v361
    %v366 = vsub.f32 %v358, %v362
    %v367 = vsub.f32 %v359, %v363
    %v368 = vsub.f32 %v192, %v300
    %v369 = vsub.f32 %v194, %v301
    %v370 = vsub.f32 %v245, %v302
    %v371 = vsub.f32 %v247, %v303
    %v372 = vsub.f32 %v196, %v300
    %v373 = vsub.f32 %v198, %v301
    %v374 = vsub.f32 %v249, %v302
    %v375 = vsub.f32 %v251, %v303
    %v376 = vsub.f32 %v202, %v300
    %v377 = vsub.f32 %v204, %v301
    %v378 = vsub.f32 %v255, %v302
    %v379 = vsub.f32 %v257, %v303
    %v380 = vsub.f32 %v206, %v300
    %v381 = vsub.f32 %v208, %v301
    %v382 = vsub.f32 %v259, %v302
    %v383 = vsub.f32 %v261, %v303
    %v384 = vadd.f32 %v364, 1e-05
    %v385 = vadd.f32 %v365, 1e-05
    %v386 = vadd.f32 %v366, 1e-05
    %v387 = vadd.f32 %v367, 1e-05
    %v388 = vrsqrt.pop %v384
    %v389 = vrsqrt.pop %v385
    %v390 = vrsqrt.pop %v386
    %v391 = vrsqrt.pop %v387
    %v392 = vmul.f32 %v368, %v388
    %v393 = vmul.f32 %v369, %v389
    %v394 = vmul.f32 %v370, %v390
    %v395 = vmul.f32 %v371, %v391
    %v396 = vmul.f32 %v372, %v388
    %v397 = vmul.f32 %v373, %v389
    %v398 = vmul.f32 %v374, %v390
    %v399 = vmul.f32 %v375, %v391
    %v400 = vmul.f32 %v376, %v388
    %v401 = vmul.f32 %v377, %v389
    %v402 = vmul.f32 %v378, %v390
    %v403 = vmul.f32 %v379, %v391
    %v404 = vmul.f32 %v380, %v388
    %v405 = vmul.f32 %v381, %v389
    %v406 = vmul.f32 %v382, %v390
    %v407 = vmul.f32 %v383, %v391
    %409 = vset.pattern.permute.xlu0 0
    %410 = vperm.xlu0 %409, %v52
    %v411 = vpop.permute.xlu0 %410
    %414 = vset.pattern.permute.xlu0 0
    %415 = vperm.xlu0 %414, %v53
    %v416 = vpop.permute.xlu0 %415
    %419 = vset.pattern.permute.xlu0 0
    %420 = vperm.xlu0 %419, %v54
    %v421 = vpop.permute.xlu0 %420
    %424 = vset.pattern.permute.xlu0 0
    %425 = vperm.xlu0 %424, %v55
    %v426 = vpop.permute.xlu0 %425
    %v428 = vmul.f32 %v392, %v411
    %v429 = vmul.f32 %v393, %v411
    %v430 = vmul.f32 %v394, %v411
    %v431 = vmul.f32 %v395, %v411
    %v432 = vmul.f32 %v396, %v416
    %v433 = vmul.f32 %v397, %v416
    %v434 = vmul.f32 %v398, %v416
    %v435 = vmul.f32 %v399, %v416
    %v436 = vmul.f32 %v400, %v421
    %v437 = vmul.f32 %v401, %v421
    %v438 = vmul.f32 %v402, %v421
    %v439 = vmul.f32 %v403, %v421
    %v440 = vmul.f32 %v404, %v426
    %v441 = vmul.f32 %v405, %v426
    %v442 = vmul.f32 %v406, %v426
    %v443 = vmul.f32 %v407, %v426
    %444 = vset.pattern.permute.xlu0 1
    %445 = vperm.xlu0 %444, %v52
    %v446 = vpop.permute.xlu0 %445
    %448 = vset.pattern.permute.xlu0 1
    %449 = vperm.xlu0 %448, %v53
    %v450 = vpop.permute.xlu0 %449
    %452 = vset.pattern.permute.xlu0 1
    %453 = vperm.xlu0 %452, %v54
    %v454 = vpop.permute.xlu0 %453
    %456 = vset.pattern.permute.xlu0 1
    %457 = vperm.xlu0 %456, %v55
    %v458 = vpop.permute.xlu0 %457
    %v460 = vadd.f32 %v428, %v446
    %v461 = vadd.f32 %v429, %v446
    %v462 = vadd.f32 %v430, %v446
    %v463 = vadd.f32 %v431, %v446
    %v464 = vadd.f32 %v432, %v450
    %v465 = vadd.f32 %v433, %v450
    %v466 = vadd.f32 %v434, %v450
    %v467 = vadd.f32 %v435, %v450
    %v468 = vadd.f32 %v436, %v454
    %v469 = vadd.f32 %v437, %v454
    %v470 = vadd.f32 %v438, %v454
    %v471 = vadd.f32 %v439, %v454
    %v472 = vadd.f32 %v440, %v458
    %v473 = vadd.f32 %v441, %v458
    %v474 = vadd.f32 %v442, %v458
    %v475 = vadd.f32 %v443, %v458
    %v476 = vmax.f32 %v460, 0.0
    %v477 = vmax.f32 %v461, 0.0
    %v478 = vmax.f32 %v462, 0.0
    %v479 = vmax.f32 %v463, 0.0
    %v480 = vmax.f32 %v464, 0.0
    %v481 = vmax.f32 %v465, 0.0
    %v482 = vmax.f32 %v466, 0.0
    %v483 = vmax.f32 %v467, 0.0
    %v484 = vmax.f32 %v468, 0.0
    %v485 = vmax.f32 %v469, 0.0
    %v486 = vmax.f32 %v470, 0.0
    %v487 = vmax.f32 %v471, 0.0
    %v488 = vmax.f32 %v472, 0.0
    %v489 = vmax.f32 %v473, 0.0
    %v490 = vmax.f32 %v474, 0.0
    %v491 = vmax.f32 %v475, 0.0
    %v492 = vld [vmem:[%s2] sm:$0xf]
    %v493 = vld [vmem:[%s2 + $0x4] sm:$0xf]
    %v494 = vpack.c.bf16 %v480, %v476
    %v495 = vpack.c.bf16 %v481, %v477
    %v496 = vpack.c.bf16 %v482, %v478
    %v497 = vpack.c.bf16 %v483, %v479
    %v498 = vpack.c.bf16 %v488, %v484
    %v499 = vpack.c.bf16 %v489, %v485
    %v500 = vpack.c.bf16 %v490, %v486
    %v501 = vpack.c.bf16 %v491, %v487
    %v504 = vunpack.c.l.b16 %v492
    %v505 = vunpack.c.l.b16 %v493
    %v506 = vpack.c.b16 %v505, %v504
    %vm507 = vcmask 261120
    %v509 = vsel %vm507, %v506, 0
    %511 = vmatprep.subr.bf16.mxu0 0
    %512 = vmatpush1.bf16.msra.mxu0 0
    %513 = vmatprep.subr.bf16.mxu0 0
    %514 = vmatpush1.bf16.msra.mxu0 0
    %515 = vmatprep.subr.bf16.mxu0 0
    %516 = vmatpush1.bf16.msra.mxu0 0
    %517 = vmatprep.subr.bf16.mxu0 0
    %518 = vmatpush1.bf16.msra.mxu0 0
    %519 = vmatprep.subr.bf16.mxu0 0
    %520 = vmatpush1.bf16.msra.mxu0 0
    %521 = vmatprep.subr.bf16.mxu0 0
    %522 = vmatpush1.bf16.msra.mxu0 0
    %523 = vmatprep.subr.bf16.mxu0 %v499
    %524 = vmatpush1.bf16.msra.mxu0 %v498
    %525 = vmatprep.subr.bf16.mxu0 %v495
    %526 = vmatpush1.bf16.msra.mxu0 %v494
    %527 = vmatprep.subr.bf16.mxu0 0
    %528 = vmatpush2.bf16.msra.mxu0 0
    %529 = vmatprep.subr.bf16.mxu0 0
    %530 = vmatpush2.bf16.msra.mxu0 0
    %531 = vmatprep.subr.bf16.mxu0 0
    %532 = vmatpush2.bf16.msra.mxu0 0
    %533 = vmatprep.subr.bf16.mxu0 0
    %534 = vmatpush2.bf16.msra.mxu0 0
    %535 = vmatprep.subr.bf16.mxu0 0
    %536 = vmatpush2.bf16.msra.mxu0 0
    %537 = vmatprep.subr.bf16.mxu0 0
    %538 = vmatpush2.bf16.msra.mxu0 0
    %539 = vmatprep.subr.bf16.mxu0 0
    %540 = vmatpush2.bf16.msra.mxu0 0
    %541 = vmatprep.subr.bf16.mxu0 0
    %542 = vmatpush2.bf16.msra.mxu0 0
    %543 = vmatprep.mubr.bf16.mxu0 0
    %544 = vmatmul.mubr.bf16.gmra.mxu0 %v509
    %v545 = vpop.f32.mrf.mxu0
    %v546 = vadd.f32 0.0, %v545
    %v547 = vpop.f32.mrf.mxu0
    %v548 = vadd.f32 0.0, %v547
    %v549 = vpop.f32.mrf.mxu0
    %v550 = vadd.f32 0.0, %v549
    %v551 = vpop.f32.mrf.mxu0
    %v552 = vadd.f32 0.0, %v551
    %553 = vdwg.mxu0
    %554 = vmatprep.subr.bf16.mxu0 0
    %555 = vmatpush1.bf16.msra.mxu0 0
    %556 = vmatprep.subr.bf16.mxu0 0
    %557 = vmatpush1.bf16.msra.mxu0 0
    %558 = vmatprep.subr.bf16.mxu0 0
    %559 = vmatpush1.bf16.msra.mxu0 0
    %560 = vmatprep.subr.bf16.mxu0 0
    %561 = vmatpush1.bf16.msra.mxu0 0
    %562 = vmatprep.subr.bf16.mxu0 0
    %563 = vmatpush1.bf16.msra.mxu0 0
    %564 = vmatprep.subr.bf16.mxu0 0
    %565 = vmatpush1.bf16.msra.mxu0 0
    %566 = vmatprep.subr.bf16.mxu0 %v501
    %567 = vmatpush1.bf16.msra.mxu0 %v500
    %568 = vmatprep.subr.bf16.mxu0 %v497
    %569 = vmatpush1.bf16.msra.mxu0 %v496
    %570 = vmatprep.subr.bf16.mxu0 0
    %571 = vmatpush2.bf16.msra.mxu0 0
    %572 = vmatprep.subr.bf16.mxu0 0
    %573 = vmatpush2.bf16.msra.mxu0 0
    %574 = vmatprep.subr.bf16.mxu0 0
    %575 = vmatpush2.bf16.msra.mxu0 0
    %576 = vmatprep.subr.bf16.mxu0 0
    %577 = vmatpush2.bf16.msra.mxu0 0
    %578 = vmatprep.subr.bf16.mxu0 0
    %579 = vmatpush2.bf16.msra.mxu0 0
    %580 = vmatprep.subr.bf16.mxu0 0
    %581 = vmatpush2.bf16.msra.mxu0 0
    %582 = vmatprep.subr.bf16.mxu0 0
    %583 = vmatpush2.bf16.msra.mxu0 0
    %584 = vmatprep.subr.bf16.mxu0 0
    %585 = vmatpush2.bf16.msra.mxu0 0
    %586 = vmatprep.mubr.bf16.mxu0 0
    %587 = vmatmul.mubr.bf16.gmra.mxu0 %v509
    %v588 = vpop.f32.mrf.mxu0
    %v589 = vadd.f32 0.0, %v588
    %v590 = vpop.f32.mrf.mxu0
    %v591 = vadd.f32 0.0, %v590
    %v592 = vpop.f32.mrf.mxu0
    %v593 = vadd.f32 0.0, %v592
    %v594 = vpop.f32.mrf.mxu0
    %v595 = vadd.f32 0.0, %v594
    %596 = vdwg.mxu0
    %v597 = vadd.f32 %v546, %v550
    %v598 = vrot.slane %v597, 4
    %v599 = vadd.f32 %v597, %v598
    %v600 = vrot.slane %v599, 2
    %v601 = vadd.f32 %v599, %v600
    %v602 = vrot.slane %v601, 1
    %v603 = vadd.f32 %v601, %v602
    %v604 = vadd.f32 %v548, %v552
    %v605 = vrot.slane %v604, 4
    %v606 = vadd.f32 %v604, %v605
    %v607 = vrot.slane %v606, 2
    %v608 = vadd.f32 %v606, %v607
    %v609 = vrot.slane %v608, 1
    %v610 = vadd.f32 %v608, %v609
    %v611 = vadd.f32 %v589, %v593
    %v612 = vrot.slane %v611, 4
    %v613 = vadd.f32 %v611, %v612
    %v614 = vrot.slane %v613, 2
    %v615 = vadd.f32 %v613, %v614
    %v616 = vrot.slane %v615, 1
    %v617 = vadd.f32 %v615, %v616
    %v618 = vadd.f32 %v591, %v595
    %v619 = vrot.slane %v618, 4
    %v620 = vadd.f32 %v618, %v619
    %v621 = vrot.slane %v620, 2
    %v622 = vadd.f32 %v620, %v621
    %v623 = vrot.slane %v622, 1
    %v624 = vadd.f32 %v622, %v623
    %v625 = vrcp.pop 16.0
    %v626 = vmul.f32 %v603, %v625
    %v627 = vmul.f32 %v610, %v625
    %v628 = vmul.f32 %v617, %v625
    %v629 = vmul.f32 %v624, %v625
    %v630 = vmul.f32 %v546, %v546
    %v631 = vmul.f32 %v548, %v548
    %v632 = vmul.f32 %v589, %v589
    %v633 = vmul.f32 %v591, %v591
    %v634 = vmul.f32 %v550, %v550
    %v635 = vmul.f32 %v552, %v552
    %v636 = vmul.f32 %v593, %v593
    %v637 = vmul.f32 %v595, %v595
    %v638 = vadd.f32 %v630, %v634
    %v639 = vrot.slane %v638, 4
    %v640 = vadd.f32 %v638, %v639
    %v641 = vrot.slane %v640, 2
    %v642 = vadd.f32 %v640, %v641
    %v643 = vrot.slane %v642, 1
    %v644 = vadd.f32 %v642, %v643
    %v645 = vadd.f32 %v631, %v635
    %v646 = vrot.slane %v645, 4
    %v647 = vadd.f32 %v645, %v646
    %v648 = vrot.slane %v647, 2
    %v649 = vadd.f32 %v647, %v648
    %v650 = vrot.slane %v649, 1
    %v651 = vadd.f32 %v649, %v650
    %v652 = vadd.f32 %v632, %v636
    %v653 = vrot.slane %v652, 4
    %v654 = vadd.f32 %v652, %v653
    %v655 = vrot.slane %v654, 2
    %v656 = vadd.f32 %v654, %v655
    %v657 = vrot.slane %v656, 1
    %v658 = vadd.f32 %v656, %v657
    %v659 = vadd.f32 %v633, %v637
    %v660 = vrot.slane %v659, 4
    %v661 = vadd.f32 %v659, %v660
    %v662 = vrot.slane %v661, 2
    %v663 = vadd.f32 %v661, %v662
    %v664 = vrot.slane %v663, 1
    %v665 = vadd.f32 %v663, %v664
    %v666 = vmul.f32 %v644, %v625
    %v667 = vmul.f32 %v651, %v625
    %v668 = vmul.f32 %v658, %v625
    %v669 = vmul.f32 %v665, %v625
    %v670 = vmul.f32 %v626, %v626
    %v671 = vmul.f32 %v627, %v627
    %v672 = vmul.f32 %v628, %v628
    %v673 = vmul.f32 %v629, %v629
    %v674 = vsub.f32 %v666, %v670
    %v675 = vsub.f32 %v667, %v671
    %v676 = vsub.f32 %v668, %v672
    %v677 = vsub.f32 %v669, %v673
    %v678 = vsub.f32 %v546, %v626
    %v679 = vsub.f32 %v548, %v627
    %v680 = vsub.f32 %v589, %v628
    %v681 = vsub.f32 %v591, %v629
    %v682 = vsub.f32 %v550, %v626
    %v683 = vsub.f32 %v552, %v627
    %v684 = vsub.f32 %v593, %v628
    %v685 = vsub.f32 %v595, %v629
    %v686 = vadd.f32 %v674, 1e-05
    %v687 = vadd.f32 %v675, 1e-05
    %v688 = vadd.f32 %v676, 1e-05
    %v689 = vadd.f32 %v677, 1e-05
    %v690 = vrsqrt.pop %v686
    %v691 = vrsqrt.pop %v687
    %v692 = vrsqrt.pop %v688
    %v693 = vrsqrt.pop %v689
    %v694 = vmul.f32 %v678, %v690
    %v695 = vmul.f32 %v679, %v691
    %v696 = vmul.f32 %v680, %v692
    %v697 = vmul.f32 %v681, %v693
    %v698 = vmul.f32 %v682, %v690
    %v699 = vmul.f32 %v683, %v691
    %v700 = vmul.f32 %v684, %v692
    %v701 = vmul.f32 %v685, %v693
    %702 = vset.pattern.permute.xlu0 2
    %703 = vperm.xlu0 %702, %v52
    %v704 = vpop.permute.xlu0 %703
    %706 = vset.pattern.permute.xlu0 2
    %707 = vperm.xlu0 %706, %v53
    %v708 = vpop.permute.xlu0 %707
    %v710 = vmul.f32 %v694, %v704
    %v711 = vmul.f32 %v695, %v704
    %v712 = vmul.f32 %v696, %v704
    %v713 = vmul.f32 %v697, %v704
    %v714 = vmul.f32 %v698, %v708
    %v715 = vmul.f32 %v699, %v708
    %v716 = vmul.f32 %v700, %v708
    %v717 = vmul.f32 %v701, %v708
    %718 = vset.pattern.permute.xlu0 3
    %719 = vperm.xlu0 %718, %v52
    %v720 = vpop.permute.xlu0 %719
    %722 = vset.pattern.permute.xlu0 3
    %723 = vperm.xlu0 %722, %v53
    %v724 = vpop.permute.xlu0 %723
    %v726 = vadd.f32 %v710, %v720
    %v727 = vadd.f32 %v711, %v720
    %v728 = vadd.f32 %v712, %v720
    %v729 = vadd.f32 %v713, %v720
    %v730 = vadd.f32 %v714, %v724
    %v731 = vadd.f32 %v715, %v724
    %v732 = vadd.f32 %v716, %v724
    %v733 = vadd.f32 %v717, %v724
    %v734 = vmax.f32 %v726, 0.0
    %v735 = vmax.f32 %v727, 0.0
    %v736 = vmax.f32 %v728, 0.0
    %v737 = vmax.f32 %v729, 0.0
    %v738 = vmax.f32 %v730, 0.0
    %v739 = vmax.f32 %v731, 0.0
    %v740 = vmax.f32 %v732, 0.0
    %v741 = vmax.f32 %v733, 0.0
    %v742 = vld [vmem:[%s3] sm:$0xf]
    %v743 = vpack.c.bf16 %v738, %v734
    %v744 = vpack.c.bf16 %v739, %v735
    %v745 = vpack.c.bf16 %v740, %v736
    %v746 = vpack.c.bf16 %v741, %v737
    %747 = vset.pattern.permute.xlu0 4
    %748 = vperm.xlu0 %747, %v52
    %v749 = vpop.permute.xlu0 %748
    %vm751 = vcmask 130048
    %v753 = vsel %vm751, %v742, 0
    %755 = vmatprep.subr.bf16.mxu0 0
    %756 = vmatpush1.bf16.msra.mxu0 0
    %757 = vmatprep.subr.bf16.mxu0 0
    %758 = vmatpush1.bf16.msra.mxu0 0
    %759 = vmatprep.subr.bf16.mxu0 0
    %760 = vmatpush1.bf16.msra.mxu0 0
    %761 = vmatprep.subr.bf16.mxu0 0
    %762 = vmatpush1.bf16.msra.mxu0 0
    %763 = vmatprep.subr.bf16.mxu0 0
    %764 = vmatpush1.bf16.msra.mxu0 0
    %765 = vmatprep.subr.bf16.mxu0 0
    %766 = vmatpush1.bf16.msra.mxu0 0
    %767 = vmatprep.subr.bf16.mxu0 0
    %768 = vmatpush1.bf16.msra.mxu0 0
    %769 = vmatprep.subr.bf16.mxu0 %v744
    %770 = vmatpush1.bf16.msra.mxu0 %v743
    %771 = vmatprep.subr.bf16.mxu0 0
    %772 = vmatpush2.bf16.msra.mxu0 0
    %773 = vmatprep.subr.bf16.mxu0 0
    %774 = vmatpush2.bf16.msra.mxu0 0
    %775 = vmatprep.subr.bf16.mxu0 0
    %776 = vmatpush2.bf16.msra.mxu0 0
    %777 = vmatprep.subr.bf16.mxu0 0
    %778 = vmatpush2.bf16.msra.mxu0 0
    %779 = vmatprep.subr.bf16.mxu0 0
    %780 = vmatpush2.bf16.msra.mxu0 0
    %781 = vmatprep.subr.bf16.mxu0 0
    %782 = vmatpush2.bf16.msra.mxu0 0
    %783 = vmatprep.subr.bf16.mxu0 0
    %784 = vmatpush2.bf16.msra.mxu0 0
    %785 = vmatprep.subr.bf16.mxu0 0
    %786 = vmatpush2.bf16.msra.mxu0 0
    %787 = vmatprep.mubr.bf16.mxu0 0
    %788 = vmatmul.mubr.bf16.gmra.mxu0 %v753
    %v789 = vpop.f32.mrf.mxu0
    %v790 = vadd.f32 %v749, %v789
    %v791 = vpop.f32.mrf.mxu0
    %v792 = vadd.f32 %v749, %v791
    %v793 = vpop.f32.mrf.mxu0
    %v794 = vpop.f32.mrf.mxu0
    %795 = vdwg.mxu0
    %796 = vmatprep.subr.bf16.mxu0 0
    %797 = vmatpush1.bf16.msra.mxu0 0
    %798 = vmatprep.subr.bf16.mxu0 0
    %799 = vmatpush1.bf16.msra.mxu0 0
    %800 = vmatprep.subr.bf16.mxu0 0
    %801 = vmatpush1.bf16.msra.mxu0 0
    %802 = vmatprep.subr.bf16.mxu0 0
    %803 = vmatpush1.bf16.msra.mxu0 0
    %804 = vmatprep.subr.bf16.mxu0 0
    %805 = vmatpush1.bf16.msra.mxu0 0
    %806 = vmatprep.subr.bf16.mxu0 0
    %807 = vmatpush1.bf16.msra.mxu0 0
    %808 = vmatprep.subr.bf16.mxu0 0
    %809 = vmatpush1.bf16.msra.mxu0 0
    %810 = vmatprep.subr.bf16.mxu0 %v746
    %811 = vmatpush1.bf16.msra.mxu0 %v745
    %812 = vmatprep.subr.bf16.mxu0 0
    %813 = vmatpush2.bf16.msra.mxu0 0
    %814 = vmatprep.subr.bf16.mxu0 0
    %815 = vmatpush2.bf16.msra.mxu0 0
    %816 = vmatprep.subr.bf16.mxu0 0
    %817 = vmatpush2.bf16.msra.mxu0 0
    %818 = vmatprep.subr.bf16.mxu0 0
    %819 = vmatpush2.bf16.msra.mxu0 0
    %820 = vmatprep.subr.bf16.mxu0 0
    %821 = vmatpush2.bf16.msra.mxu0 0
    %822 = vmatprep.subr.bf16.mxu0 0
    %823 = vmatpush2.bf16.msra.mxu0 0
    %824 = vmatprep.subr.bf16.mxu0 0
    %825 = vmatpush2.bf16.msra.mxu0 0
    %826 = vmatprep.subr.bf16.mxu0 0
    %827 = vmatpush2.bf16.msra.mxu0 0
    %828 = vmatprep.mubr.bf16.mxu0 0
    %829 = vmatmul.mubr.bf16.gmra.mxu0 %v753
    %v830 = vpop.f32.mrf.mxu0
    %v831 = vadd.f32 %v749, %v830
    %v832 = vpop.f32.mrf.mxu0
    %v833 = vadd.f32 %v749, %v832
    %v834 = vpop.f32.mrf.mxu0
    %v835 = vpop.f32.mrf.mxu0
    %836 = vdwg.mxu0
    %v837 = vmul.f32 %v790, %v790
    %v838 = vmul.f32 %v792, %v792
    %v839 = vmul.f32 %v831, %v831
    %v840 = vmul.f32 %v833, %v833
    %v841 = vrot.slane %v837, 4
    %v842 = vadd.f32 %v837, %v841
    %v843 = vrot.slane %v842, 2
    %v844 = vadd.f32 %v842, %v843
    %v845 = vrot.slane %v844, 1
    %v846 = vadd.f32 %v844, %v845
    %v847 = vrot.slane %v838, 4
    %v848 = vadd.f32 %v838, %v847
    %v849 = vrot.slane %v848, 2
    %v850 = vadd.f32 %v848, %v849
    %v851 = vrot.slane %v850, 1
    %v852 = vadd.f32 %v850, %v851
    %v853 = vrot.slane %v839, 4
    %v854 = vadd.f32 %v839, %v853
    %v855 = vrot.slane %v854, 2
    %v856 = vadd.f32 %v854, %v855
    %v857 = vrot.slane %v856, 1
    %v858 = vadd.f32 %v856, %v857
    %v859 = vrot.slane %v840, 4
    %v860 = vadd.f32 %v840, %v859
    %v861 = vrot.slane %v860, 2
    %v862 = vadd.f32 %v860, %v861
    %v863 = vrot.slane %v862, 1
    %v864 = vadd.f32 %v862, %v863
    %v865 = vmax.f32 %v846, 1e-24
    %v866 = vmax.f32 %v852, 1e-24
    %v867 = vmax.f32 %v858, 1e-24
    %v868 = vmax.f32 %v864, 1e-24
    %v869 = vrsqrt.pop %v865
    %v870 = vrsqrt.pop %v866
    %v871 = vrsqrt.pop %v867
    %v872 = vrsqrt.pop %v868
    %v873 = vmul.f32 %v790, %v869
    %v874 = vmul.f32 %v792, %v870
    %v875 = vmul.f32 %v831, %v871
    %v876 = vmul.f32 %v833, %v872
    %v881 = vcombine.low %v873, %v874
    %v882 = vcombine.low %v875, %v876
    %885 = vst [vmem:[#allocation5] sm:$0x77] %v881
    %886 = vst [vmem:[#allocation5 + $0x8] sm:$0x77] %v882
    // Predicated region
    $region26: #{tpu_custom_call.1} parent=1 // pred_check
      _
    $region27: #{tpu_custom_call.1} parent=1 // pred_check_branch
      %888 = sbr.rel (0) target = $region29
    $region28: #{tpu_custom_call.1} parent=1 // pred_region
      %s890 = ssub.s32 256, 256
      %891 = vsyncadd [#allocation4], %s890
      %s893 = sshll.u32 [#allocation5], 4
      %s894 = int_to_ptr.vmem [resolvable:$true] %s893
      %896 = dma.vmem_to_hbm [thread:$0]  %s894, 256, %s5, [#allocation4]
    $region29: #{tpu_custom_call.1} parent=1 // pred_fallthru
      _
    // Predicated region
    $region30: #{tpu_custom_call.1} parent=1 // pred_check
      _
    $region31: #{tpu_custom_call.1} parent=1 // pred_check_branch
      %898 = sbr.rel (0) target = $region33
    $region32: #{tpu_custom_call.1} parent=1 // pred_region
      %899 = dma.done [#allocation4], 256
    $region33: #{tpu_custom_call.1} parent=1 // pred_fallthru
      _
    %900 = vsyncpa [#allocation3], 1
    %901 = vsyncpa [#allocation4], 1

</llo_original>
